<compile_context>
chip_gen: v7x
topology: tpu7x:2x2x1
jax: 0.10.0
libtpu: 0.0.40
codegen_flags: <defaults>
</compile_context>

<pallas_src>
import functools

import jax
import jax.numpy as jnp
from jax.experimental import pallas as pl
from jax.experimental.pallas import tpu as pltpu

_LANE = 128


def _fm_kernel(x_ref, vw_ref, s_ref, b_ref, o_ref, *, latent_dim, lane_major):
    """One batch tile of the FM forward pass.

    x_ref : (TB, D)    input rows, x's native dtype (bf16 goes straight to MXU)
    vw_ref: (D, K+1)   [v | w] -> one MXU matmul gives interaction + linear
    s_ref : (D, 1)     rowsum(v*v), precomputed in the wrapper (f32)
    b_ref : (1, 1)     linear bias (SMEM scalar)
    o_ref : (1, TB) f32 if lane_major else (TB, 1) f32
    """
    x = x_ref[...]                                                      # (TB, D)

    # One MXU dispatch: columns [0:K] = x @ v, column [K] = x @ w.
    xvl = jnp.dot(x, vw_ref[...], preferred_element_type=jnp.float32)  # (TB, K+1)
    xv = xvl[:, :latent_dim]                                            # (TB, K)
    linear = xvl[:, latent_dim:latent_dim + 1]                          # (TB, 1)

    # sum_k[(x^2 @ v^2)] == (x^2) @ rowsum(v^2): matvec instead of matmul.
    x32 = x.astype(jnp.float32)
    sum_of_square = jnp.dot(x32 * x32, s_ref[...],
                            preferred_element_type=jnp.float32)         # (TB, 1)
    square_of_sum = jnp.sum(xv * xv, axis=1, keepdims=True)             # (TB, 1)

    res = linear + b_ref[0, 0] + 0.5 * (square_of_sum - sum_of_square)  # (TB, 1)

    if lane_major:
        # Lane-dense store: (TB,1) column -> (1,TB) row (cheap XLU relayout,
        # unmasked vector stores, dense VMEM output buffer).
        o_ref[...] = jnp.reshape(res, (1, res.shape[0]))
    else:
        o_ref[...] = res


def _vmem_limit_bytes():
    """Generation-aware scoped-VMEM limit (v7x: 64 MiB total; v5e/v6e: 128 MiB)."""
    try:
        cap = int(pltpu.get_tpu_info().vmem_capacity_bytes)
    except Exception:
        cap = 64 * 1024 * 1024            # conservative (v7x-sized) fallback
    return min(cap * 3 // 4, 112 * 1024 * 1024)


def _pick_batch_tile(B, D, K, x_itemsize, vmem_limit):
    """Batch-tile size from a lane-padding-aware VMEM cost model.

    Accounts for: x rows lane-padded to roundup(D,128) in VMEM (double
    buffered), f32 lane-padded temporaries (x^2, x@[v|w], (x@v)^2, result),
    the (1, tb) output buffers, and the resident weight tiles.
    """
    lx = pl.cdiv(D, _LANE) * _LANE
    lk = pl.cdiv(K + 1, _LANE) * _LANE
    per_row = 2 * lx * x_itemsize                 # double-buffered x window
    per_row += (lx + 2 * lk + _LANE) * 4          # f32 temporaries (lane-padded)
    per_row += 2 * 8 * 4                          # (1, tb) out buffers (8 sublanes, x2)
    weights = 2 * D * (lk + _LANE) * 4            # resident [v|w] + rowsum(v^2)
    budget = max(1 << 20, int(vmem_limit * 0.55) - weights)
    tb = budget // per_row
    tb = int(max(8, min(tb, 32768)))
    if tb >= B:
        return B                                  # single tile == full array dims
    return (tb // 8) * 8                          # sublane alignment


def factorization_machine(x, v, w, b, *, block_b=None):
    """FactorizationMachine_v forward.

    x: (B, D); v: (D, K); w: (D, 1) (Linear weight, transposed); b: bias.
    Returns (B, 1) float32.
    """
    B, D = x.shape
    Dv, K = v.shape
    assert Dv == D

    # --- wrapper-side precomputation (tiny, once per call) ---
    xdt = x.dtype
    w_col = jnp.reshape(w, (D, 1)).astype(xdt)
    vw = jnp.concatenate([v.astype(xdt), w_col], axis=1)       # (D, K+1), x dtype
    v32 = v.astype(jnp.float32)
    s = jnp.sum(v32 * v32, axis=1, keepdims=True)              # (D, 1) f32
    b2 = jnp.reshape(b, (1, 1)).astype(jnp.float32)            # SMEM scalar

    vmem_limit = _vmem_limit_bytes()
    x_isz = jnp.dtype(xdt).itemsize
    if block_b is None:
        tb = _pick_batch_tile(B, D, K, x_isz, vmem_limit)
    else:
        tb = B if int(block_b) >= B else max(8, (int(block_b) // 8) * 8)

    def call(tile_b, lane_major):
        nt = pl.cdiv(B, tile_b)                   # ragged last block is clipped
        if lane_major:
            out_shape = jax.ShapeDtypeStruct((nt, tile_b), jnp.float32)
            out_spec = pl.BlockSpec((1, tile_b), lambda i: (i, 0))
        else:
            out_shape = jax.ShapeDtypeStruct((B, 1), jnp.float32)
            out_spec = pl.BlockSpec((tile_b, 1), lambda i: (i, 0))
        kern = functools.partial(_fm_kernel, latent_dim=K, lane_major=lane_major)
        return pl.pallas_call(
            kern,
            out_shape=out_shape,
            grid=(nt,),
            in_specs=[
                pl.BlockSpec((tile_b, D), lambda i: (i, 0)),        # x: batch-tiled
                pl.BlockSpec((D, K + 1), lambda i: (0, 0)),         # [v|w]: resident
                pl.BlockSpec((D, 1), lambda i: (0, 0)),             # rowsum(v^2): resident
                pl.BlockSpec(memory_space=pltpu.MemorySpace.SMEM),  # bias scalar
            ],
            out_specs=out_spec,
            compiler_params=pltpu.CompilerParams(
                dimension_semantics=("parallel",),  # shard batch across TCs
                vmem_limit_bytes=vmem_limit,
            ),
        )(x, vw, s, b2)

    try:
        out = call(tb, lane_major=True)           # (num_tiles, tb) lane-dense slab
        return jnp.reshape(out, (-1, 1))[:B]      # bitcast reshape + tail slice
    except Exception:
        # Safety net: column-output variant (masked stores) with a modest tile
        # so the lane-padded (tile,1) output buffers stay small.
        tb2 = tb if tb <= 2048 else 2048
        return call(tb2, lane_major=False)[:B]


def _reference(x, v, w, b):
    # precision="highest" so the XLA reference matches true-f32 math (the
    # Mosaic f32 matmul path is the accurate one).
    with jax.default_matmul_precision("highest"):
        linear = x @ jnp.reshape(w, (x.shape[1], 1)) + jnp.reshape(b, (1, 1))
        square_of_sum = (x @ v) ** 2
        sum_of_square = (x ** 2) @ (v ** 2)
        pair = jnp.sum(square_of_sum - sum_of_square, axis=1, keepdims=True)
        return linear + 0.5 * pair


if __name__ == "__main__":
    input_dim = 32    # D
    latent_dim = 16   # K
    batch = 8         # B

    key = jax.random.PRNGKey(0)
    k_x, k_v, k_w, k_b, k_x2 = jax.random.split(key, 5)

    x = jax.random.normal(k_x, (batch, input_dim), dtype=jnp.float32)
    # Parameter init mirroring the module's __init__ shapes:
    #   v ~ U[0,1) of shape (input_dim, latent_dim); Linear(input_dim, 1).
    v = jax.random.uniform(k_v, (input_dim, latent_dim), dtype=jnp.float32)
    lim = float(input_dim) ** -0.5
    w = jax.random.uniform(k_w, (input_dim, 1), dtype=jnp.float32,
                           minval=-lim, maxval=lim)
    b = jax.random.uniform(k_b, (1, 1), dtype=jnp.float32,
                           minval=-lim, maxval=lim)

    # Loose-ish tolerance: the MXU f32 matmul may use bf16 multi-pass schemes
    # depending on precision defaults; the algebra itself is exact.
    out = jax.block_until_ready(factorization_machine(x, v, w, b))
    ref = _reference(x, v, w, b)
    assert out.shape == (batch, 1)
    assert jnp.allclose(out, ref, rtol=2e-2, atol=2e-2), (out, ref)

    # Multi-tile + ragged-batch path (no wrapper pad; lane-dense output slab).
    x_big = jax.random.normal(k_x2, (300, input_dim), dtype=jnp.float32)
    out_big = jax.block_until_ready(
        factorization_machine(x_big, v, w, b, block_b=128))
    ref_big = _reference(x_big, v, w, b)
    assert out_big.shape == (300, 1)
    assert jnp.allclose(out_big, ref_big, rtol=2e-2, atol=2e-2)

    print("KERNEL_OK")
</pallas_src>

<mosaic_0001>
module attributes {stable_mosaic.version = 11 : i64} {
  func.func @_fm_kernel(%arg0: i32, %arg1: memref<8x32xf32, #tpu.memory_space<vmem>>, %arg2: memref<32x17xf32, #tpu.memory_space<vmem>>, %arg3: memref<32x1xf32, #tpu.memory_space<vmem>>, %arg4: memref<1x1xf32, #tpu.memory_space<smem>>, %arg5: memref<1x8xf32, #tpu.memory_space<vmem>>) attributes {dimension_semantics = [#tpu.dimension_semantics<parallel>], iteration_bounds = array<i64: 1>, scalar_prefetch = 0 : i64, scratch_operands = 0 : i64, tpu.core_type = #tpu.core_type<tc>, window_params = [{transform_indices = @transform_0, window_bounds = array<i64: 8, 32>}, {pipeline_mode = #tpu.pipeline_mode<synchronous>, transform_indices = @transform_1, window_bounds = array<i64: 32, 17>}, {pipeline_mode = #tpu.pipeline_mode<synchronous>, transform_indices = @transform_2, window_bounds = array<i64: 32, 1>}, {transform_indices = @transform_3, window_bounds = array<i64: 1, 1>}, {transform_indices = @transform_4, window_bounds = array<i64: 1, 8>}]} {
    %c0 = arith.constant 0 : index
    %c0_0 = arith.constant 0 : index
    %0 = vector.load %arg1[%c0, %c0_0] : memref<8x32xf32, #tpu.memory_space<vmem>>, vector<8x32xf32>
    %c0_1 = arith.constant 0 : index
    %c0_2 = arith.constant 0 : index
    %1 = vector.load %arg2[%c0_1, %c0_2] : memref<32x17xf32, #tpu.memory_space<vmem>>, vector<32x17xf32>
    %cst = arith.constant dense<0.000000e+00> : vector<8x17xf32>
    %2 = tpu.matmul %0, %1, %cst {dimension_numbers = #tpu.dot_dimension_numbers<[1], [0], [0], [1], [0, 0, 1, 1], [], []>} : vector<8x32xf32>, vector<32x17xf32>, vector<8x17xf32> -> vector<8x17xf32>
    %3 = vector.extract_strided_slice %2 {offsets = [0, 0], sizes = [8, 16], strides = [1, 1]} : vector<8x17xf32> to vector<8x16xf32>
    %4 = vector.extract_strided_slice %2 {offsets = [0, 16], sizes = [8, 1], strides = [1, 1]} : vector<8x17xf32> to vector<8x1xf32>
    %5 = arith.mulf %0, %0 : vector<8x32xf32>
    %c0_3 = arith.constant 0 : index
    %c0_4 = arith.constant 0 : index
    %6 = vector.load %arg3[%c0_3, %c0_4] : memref<32x1xf32, #tpu.memory_space<vmem>>, vector<32x1xf32>
    %cst_5 = arith.constant dense<0.000000e+00> : vector<8x1xf32>
    %7 = tpu.matmul %5, %6, %cst_5 {dimension_numbers = #tpu.dot_dimension_numbers<[1], [0], [0], [1], [0, 0, 1, 1], [], []>} : vector<8x32xf32>, vector<32x1xf32>, vector<8x1xf32> -> vector<8x1xf32>
    %8 = arith.mulf %3, %3 : vector<8x16xf32>
    %cst_6 = arith.constant dense<0.000000e+00> : vector<8xf32>
    %9 = vector.multi_reduction <add>, %8, %cst_6 [1] : vector<8x16xf32> to vector<8xf32>
    %10 = vector.shape_cast %9 : vector<8xf32> to vector<8x1xf32>
    %c0_7 = arith.constant 0 : index
    %c0_8 = arith.constant 0 : index
    %11 = memref.load %arg4[%c0_7, %c0_8] : memref<1x1xf32, #tpu.memory_space<smem>>
    %12 = vector.broadcast %11 : f32 to vector<8x1xf32>
    %13 = arith.addf %4, %12 : vector<8x1xf32>
    %14 = arith.subf %10, %7 : vector<8x1xf32>
    %cst_9 = arith.constant 5.000000e-01 : f32
    %15 = vector.broadcast %cst_9 : f32 to vector<8x1xf32>
    %16 = arith.mulf %15, %14 : vector<8x1xf32>
    %17 = arith.addf %13, %16 : vector<8x1xf32>
    %18 = vector.shape_cast %17 : vector<8x1xf32> to vector<1x8xf32>
    %c0_10 = arith.constant 0 : index
    %c0_11 = arith.constant 0 : index
    %19 = vector.load %arg5[%c0_10, %c0_11] : memref<1x8xf32, #tpu.memory_space<vmem>>, vector<1x8xf32>
    tpu.vector_store %arg5[%c0_10, %c0_11], %18 {strides = array<i32>} : memref<1x8xf32, #tpu.memory_space<vmem>>, vector<1x8xf32>,
    return
  }
  func.func @transform_0(%arg0: i32) -> (i32, i32) {
    %c0_i32 = arith.constant 0 : i32
    %c0_i32_0 = arith.constant 0 : i32
    return %arg0, %c0_i32 : i32, i32
  }
  func.func @transform_1(%arg0: i32) -> (i32, i32) {
    %c0_i32 = arith.constant 0 : i32
    %c0_i32_0 = arith.constant 0 : i32
    %c0_i32_1 = arith.constant 0 : i32
    return %c0_i32, %c0_i32_0 : i32, i32
  }
  func.func @transform_2(%arg0: i32) -> (i32, i32) {
    %c0_i32 = arith.constant 0 : i32
    %c0_i32_0 = arith.constant 0 : i32
    %c0_i32_1 = arith.constant 0 : i32
    return %c0_i32, %c0_i32_0 : i32, i32
  }
  func.func @transform_3(%arg0: i32) -> (i32, i32) {
    %c0_i32 = arith.constant 0 : i32
    %c0_i32_0 = arith.constant 0 : i32
    %c0_i32_1 = arith.constant 0 : i32
    return %c0_i32, %c0_i32_0 : i32, i32
  }
  func.func @transform_4(%arg0: i32) -> (i32, i32) {
    %c0_i32 = arith.constant 0 : i32
    %c0_i32_0 = arith.constant 0 : i32
    return %arg0, %c0_i32 : i32, i32
  }
}

module attributes {stable_mosaic.version = 11 : i64} {
  func.func @_fm_kernel(%arg0: i32, %arg1: memref<8x32xf32, #tpu.memory_space<vmem>>, %arg2: memref<32x17xf32, #tpu.memory_space<vmem>>, %arg3: memref<32x1xf32, #tpu.memory_space<vmem>>, %arg4: memref<1x1xf32, #tpu.memory_space<smem>>, %arg5: memref<8x1xf32, #tpu.memory_space<vmem>>) attributes {dimension_semantics = [#tpu.dimension_semantics<parallel>], iteration_bounds = array<i64: 1>, scalar_prefetch = 0 : i64, scratch_operands = 0 : i64, tpu.core_type = #tpu.core_type<tc>, window_params = [{transform_indices = @transform_0, window_bounds = array<i64: 8, 32>}, {pipeline_mode = #tpu.pipeline_mode<synchronous>, transform_indices = @transform_1, window_bounds = array<i64: 32, 17>}, {pipeline_mode = #tpu.pipeline_mode<synchronous>, transform_indices = @transform_2, window_bounds = array<i64: 32, 1>}, {transform_indices = @transform_3, window_bounds = array<i64: 1, 1>}, {transform_indices = @transform_4, window_bounds = array<i64: 8, 1>}]} {
    %c0 = arith.constant 0 : index
    %c0_0 = arith.constant 0 : index
    %0 = vector.load %arg1[%c0, %c0_0] : memref<8x32xf32, #tpu.memory_space<vmem>>, vector<8x32xf32>
    %c0_1 = arith.constant 0 : index
    %c0_2 = arith.constant 0 : index
    %1 = vector.load %arg2[%c0_1, %c0_2] : memref<32x17xf32, #tpu.memory_space<vmem>>, vector<32x17xf32>
    %cst = arith.constant dense<0.000000e+00> : vector<8x17xf32>
    %2 = tpu.matmul %0, %1, %cst {dimension_numbers = #tpu.dot_dimension_numbers<[1], [0], [0], [1], [0, 0, 1, 1], [], []>} : vector<8x32xf32>, vector<32x17xf32>, vector<8x17xf32> -> vector<8x17xf32>
    %3 = vector.extract_strided_slice %2 {offsets = [0, 0], sizes = [8, 16], strides = [1, 1]} : vector<8x17xf32> to vector<8x16xf32>
    %4 = vector.extract_strided_slice %2 {offsets = [0, 16], sizes = [8, 1], strides = [1, 1]} : vector<8x17xf32> to vector<8x1xf32>
    %5 = arith.mulf %0, %0 : vector<8x32xf32>
    %c0_3 = arith.constant 0 : index
    %c0_4 = arith.constant 0 : index
    %6 = vector.load %arg3[%c0_3, %c0_4] : memref<32x1xf32, #tpu.memory_space<vmem>>, vector<32x1xf32>
    %cst_5 = arith.constant dense<0.000000e+00> : vector<8x1xf32>
    %7 = tpu.matmul %5, %6, %cst_5 {dimension_numbers = #tpu.dot_dimension_numbers<[1], [0], [0], [1], [0, 0, 1, 1], [], []>} : vector<8x32xf32>, vector<32x1xf32>, vector<8x1xf32> -> vector<8x1xf32>
    %8 = arith.mulf %3, %3 : vector<8x16xf32>
    %cst_6 = arith.constant dense<0.000000e+00> : vector<8xf32>
    %9 = vector.multi_reduction <add>, %8, %cst_6 [1] : vector<8x16xf32> to vector<8xf32>
    %10 = vector.shape_cast %9 : vector<8xf32> to vector<8x1xf32>
    %c0_7 = arith.constant 0 : index
    %c0_8 = arith.constant 0 : index
    %11 = memref.load %arg4[%c0_7, %c0_8] : memref<1x1xf32, #tpu.memory_space<smem>>
    %12 = vector.broadcast %11 : f32 to vector<8x1xf32>
    %13 = arith.addf %4, %12 : vector<8x1xf32>
    %14 = arith.subf %10, %7 : vector<8x1xf32>
    %cst_9 = arith.constant 5.000000e-01 : f32
    %15 = vector.broadcast %cst_9 : f32 to vector<8x1xf32>
    %16 = arith.mulf %15, %14 : vector<8x1xf32>
    %17 = arith.addf %13, %16 : vector<8x1xf32>
    %c0_10 = arith.constant 0 : index
    %c0_11 = arith.constant 0 : index
    %18 = vector.load %arg5[%c0_10, %c0_11] : memref<8x1xf32, #tpu.memory_space<vmem>>, vector<8x1xf32>
    tpu.vector_store %arg5[%c0_10, %c0_11], %17 {strides = array<i32>} : memref<8x1xf32, #tpu.memory_space<vmem>>, vector<8x1xf32>,
    return
  }
  func.func @transform_0(%arg0: i32) -> (i32, i32) {
    %c0_i32 = arith.constant 0 : i32
    %c0_i32_0 = arith.constant 0 : i32
    return %arg0, %c0_i32 : i32, i32
  }
  func.func @transform_1(%arg0: i32) -> (i32, i32) {
    %c0_i32 = arith.constant 0 : i32
    %c0_i32_0 = arith.constant 0 : i32
    %c0_i32_1 = arith.constant 0 : i32
    return %c0_i32, %c0_i32_0 : i32, i32
  }
  func.func @transform_2(%arg0: i32) -> (i32, i32) {
    %c0_i32 = arith.constant 0 : i32
    %c0_i32_0 = arith.constant 0 : i32
    %c0_i32_1 = arith.constant 0 : i32
    return %c0_i32, %c0_i32_0 : i32, i32
  }
  func.func @transform_3(%arg0: i32) -> (i32, i32) {
    %c0_i32 = arith.constant 0 : i32
    %c0_i32_0 = arith.constant 0 : i32
    %c0_i32_1 = arith.constant 0 : i32
    return %c0_i32, %c0_i32_0 : i32, i32
  }
  func.func @transform_4(%arg0: i32) -> (i32, i32) {
    %c0_i32 = arith.constant 0 : i32
    %c0_i32_0 = arith.constant 0 : i32
    return %arg0, %c0_i32 : i32, i32
  }
}

</mosaic_0001>

<llo_original>
// kernel: tpu_custom_call.1
$region0: #{tpu_custom_call.1}
  #allocation0 [shape = 'u32[]', space=smem, size = 0x4, offset = 0x4, fixed_abs, tag = 'smem constant byte address 0x4 - core index']
  #allocation1 [shape = 'u32[144,128]{1,0:T(1,128)}', space=vmem, size = 0x12000, scoped, tag = 'internal scratch']
  #allocation2 [shape = 'f32[1,1]{1,0:T(1,128)S(6)}', space=smem, size = 0x200, scoped, tag = 'scoped memory for tpu_custom_call.1']
  %s0 = inlined_call_operand.vmem [shape: f32[8,32], index: 0, kind: input, shape index: {}]
  %s1 = inlined_call_operand.vmem [shape: f32[32,17], index: 1, kind: input, shape index: {}]
  %s2 = inlined_call_operand.vmem [shape: f32[32,1], index: 2, kind: input, shape index: {}]
  %s3 = inlined_call_operand.<no memory space> [shape: f32[1,1], index: 3, kind: input, shape index: {}]
  %s4 = inlined_call_operand.hbm [shape: f32[1,8], index: 4, kind: output, shape index: {}]
  %s5 = sld [smem:[#allocation0]]
  $region26: #{tpu_custom_call.1} parent=0
    _
  %s7 = ssub.s32 1, %s5
  %s8 = scalar_select 0, %s7, %s5
  %9 = sst [smem:[#allocation2]] %s3
  $region1: #{tpu_custom_call.1} parent=0
    #allocation3 [shape = 'u8[512]{0}', space=vmem, size = 0x400, scoped, tag = 'output window, operand 0, single buffered']
    #allocation4 [shape = 's32[1]{0}', space=sflag, size = 0x4, scoped, tag = 'scoped memory for tpu_custom_call.1']
    %10 = vsyncpa [#allocation4], 0
    // Predicated region
    $region2: #{tpu_custom_call.1} parent=1 // pred_check
      _
    $region3: #{tpu_custom_call.1} parent=1 // pred_check_branch
      %12 = sbr.rel (0) target = $region5
    $region4: #{tpu_custom_call.1} parent=1 // pred_region
      _
    $region5: #{tpu_custom_call.1} parent=1 // pred_fallthru
      _
    // Predicated region
    $region6: #{tpu_custom_call.1} parent=1 // pred_check
      _
    $region7: #{tpu_custom_call.1} parent=1 // pred_check_branch
      %14 = sbr.rel (0) target = $region9
    $region8: #{tpu_custom_call.1} parent=1 // pred_region
      _
    $region9: #{tpu_custom_call.1} parent=1 // pred_fallthru
      _
    // Predicated region
    $region10: #{tpu_custom_call.1} parent=1 // pred_check
      _
    $region11: #{tpu_custom_call.1} parent=1 // pred_check_branch
      %16 = sbr.rel (0) target = $region13
    $region12: #{tpu_custom_call.1} parent=1 // pred_region
      _
    $region13: #{tpu_custom_call.1} parent=1 // pred_fallthru
      _
    // Predicated region
    $region14: #{tpu_custom_call.1} parent=1 // pred_check
      _
    $region15: #{tpu_custom_call.1} parent=1 // pred_check_branch
      %18 = sbr.rel (0) target = $region17
    $region16: #{tpu_custom_call.1} parent=1 // pred_region
      _
    $region17: #{tpu_custom_call.1} parent=1 // pred_fallthru
      _
    %v19 = vld [vmem:[%s0] sm:$0xff]
    %v20 = vld [vmem:[%s1] sm:$0xff]
    %v21 = vld [vmem:[%s1 + $0x8] sm:$0xff]
    %v22 = vld [vmem:[%s1 + $0x10] sm:$0xff]
    %v23 = vld [vmem:[%s1 + $0x18] sm:$0xff]
    %vm24 = vcmask 261120
    %v26 = vsel %vm24, %v19, 0
    %28 = vmatprep.subr.mxu0 0.0
    %29 = vmatpush1.msra.mxu0 %v20
    %30 = vmatprep.subr.mxu0 0.0
    %31 = vmatpush1.msra.mxu0 %v21
    %32 = vmatprep.subr.mxu0 0.0
    %33 = vmatpush1.msra.mxu0 %v22
    %34 = vmatprep.subr.mxu0 0.0
    %35 = vmatpush1.msra.mxu0 %v23
    %36 = vmatprep.subr.mxu0 0.0
    %37 = vmatpush1.msra.mxu0 0.0
    %38 = vmatprep.subr.mxu0 0.0
    %39 = vmatpush1.msra.mxu0 0.0
    %40 = vmatprep.subr.mxu0 0.0
    %41 = vmatpush1.msra.mxu0 0.0
    %42 = vmatprep.subr.mxu0 0.0
    %43 = vmatpush1.msra.mxu0 0.0
    %44 = vmatprep.subr.mxu0 0.0
    %45 = vmatpush1.msra.mxu0 0.0
    %46 = vmatprep.subr.mxu0 0.0
    %47 = vmatpush1.msra.mxu0 0.0
    %48 = vmatprep.subr.mxu0 0.0
    %49 = vmatpush1.msra.mxu0 0.0
    %50 = vmatprep.subr.mxu0 0.0
    %51 = vmatpush1.msra.mxu0 0.0
    %52 = vmatprep.subr.mxu0 0.0
    %53 = vmatpush1.msra.mxu0 0.0
    %54 = vmatprep.subr.mxu0 0.0
    %55 = vmatpush1.msra.mxu0 0.0
    %56 = vmatprep.subr.mxu0 0.0
    %57 = vmatpush1.msra.mxu0 0.0
    %58 = vmatprep.subr.mxu0 0.0
    %59 = vmatpush1.msra.mxu0 0.0
    %60 = vmatprep.subr.mxu0 0.0
    %61 = vmatpush1.msra.mxu0 0.0
    %62 = vmatprep.subr.mxu0 0.0
    %63 = vmatpush1.msra.mxu0 0.0
    %64 = vmatprep.subr.mxu0 0.0
    %65 = vmatpush1.msra.mxu0 0.0
    %66 = vmatprep.subr.mxu0 0.0
    %67 = vmatpush1.msra.mxu0 0.0
    %68 = vmatprep.subr.mxu0 0.0
    %69 = vmatpush1.msra.mxu0 0.0
    %70 = vmatprep.subr.mxu0 0.0
    %71 = vmatpush1.msra.mxu0 0.0
    %72 = vmatprep.subr.mxu0 0.0
    %73 = vmatpush1.msra.mxu0 0.0
    %74 = vmatprep.subr.mxu0 0.0
    %75 = vmatpush1.msra.mxu0 0.0
    %76 = vmatprep.subr.mxu0 0.0
    %77 = vmatpush1.msra.mxu0 0.0
    %78 = vmatprep.subr.mxu0 0.0
    %79 = vmatpush1.msra.mxu0 0.0
    %80 = vmatprep.subr.mxu0 0.0
    %81 = vmatpush1.msra.mxu0 0.0
    %82 = vmatprep.subr.mxu0 0.0
    %83 = vmatpush1.msra.mxu0 0.0
    %84 = vmatprep.subr.mxu0 0.0
    %85 = vmatpush1.msra.mxu0 0.0
    %86 = vmatprep.subr.mxu0 0.0
    %87 = vmatpush1.msra.mxu0 0.0
    %88 = vmatprep.subr.mxu0 0.0
    %89 = vmatpush1.msra.mxu0 0.0
    %90 = vmatprep.subr.mxu0 0.0
    %91 = vmatpush1.msra.mxu0 0.0
    %92 = vmatprep.mubr.f32.mxu0 0.0
    %93 = vmatmul.mubr.f32.gmra.mrb[0].mxu0 %v26
    %v94 = vpop.f32.mrb[0].mxu0
    %v95 = vadd.f32 0.0, %v94
    %v96 = vpop.f32.mrb[0].mxu0
    %97 = vdwg.mxu0
    %v98 = vmul.f32 %v19, %v19
    %v99 = vld [vmem:[%s2] sm:$0xff]
    %v100 = vld [vmem:[%s2 + $0x8] sm:$0xff]
    %v101 = vld [vmem:[%s2 + $0x10] sm:$0xff]
    %v102 = vld [vmem:[%s2 + $0x18] sm:$0xff]
    %v104 = vsel %vm24, %v98, 0
    %106 = vmatprep.subr.mxu0 0.0
    %107 = vmatpush1.msra.mxu0 %v99
    %108 = vmatprep.subr.mxu0 0.0
    %109 = vmatpush1.msra.mxu0 %v100
    %110 = vmatprep.subr.mxu0 0.0
    %111 = vmatpush1.msra.mxu0 %v101
    %112 = vmatprep.subr.mxu0 0.0
    %113 = vmatpush1.msra.mxu0 %v102
    %114 = vmatprep.subr.mxu0 0.0
    %115 = vmatpush1.msra.mxu0 0.0
    %116 = vmatprep.subr.mxu0 0.0
    %117 = vmatpush1.msra.mxu0 0.0
    %118 = vmatprep.subr.mxu0 0.0
    %119 = vmatpush1.msra.mxu0 0.0
    %120 = vmatprep.subr.mxu0 0.0
    %121 = vmatpush1.msra.mxu0 0.0
    %122 = vmatprep.subr.mxu0 0.0
    %123 = vmatpush1.msra.mxu0 0.0
    %124 = vmatprep.subr.mxu0 0.0
    %125 = vmatpush1.msra.mxu0 0.0
    %126 = vmatprep.subr.mxu0 0.0
    %127 = vmatpush1.msra.mxu0 0.0
    %128 = vmatprep.subr.mxu0 0.0
    %129 = vmatpush1.msra.mxu0 0.0
    %130 = vmatprep.subr.mxu0 0.0
    %131 = vmatpush1.msra.mxu0 0.0
    %132 = vmatprep.subr.mxu0 0.0
    %133 = vmatpush1.msra.mxu0 0.0
    %134 = vmatprep.subr.mxu0 0.0
    %135 = vmatpush1.msra.mxu0 0.0
    %136 = vmatprep.subr.mxu0 0.0
    %137 = vmatpush1.msra.mxu0 0.0
    %138 = vmatprep.subr.mxu0 0.0
    %139 = vmatpush1.msra.mxu0 0.0
    %140 = vmatprep.subr.mxu0 0.0
    %141 = vmatpush1.msra.mxu0 0.0
    %142 = vmatprep.subr.mxu0 0.0
    %143 = vmatpush1.msra.mxu0 0.0
    %144 = vmatprep.subr.mxu0 0.0
    %145 = vmatpush1.msra.mxu0 0.0
    %146 = vmatprep.subr.mxu0 0.0
    %147 = vmatpush1.msra.mxu0 0.0
    %148 = vmatprep.subr.mxu0 0.0
    %149 = vmatpush1.msra.mxu0 0.0
    %150 = vmatprep.subr.mxu0 0.0
    %151 = vmatpush1.msra.mxu0 0.0
    %152 = vmatprep.subr.mxu0 0.0
    %153 = vmatpush1.msra.mxu0 0.0
    %154 = vmatprep.subr.mxu0 0.0
    %155 = vmatpush1.msra.mxu0 0.0
    %156 = vmatprep.subr.mxu0 0.0
    %157 = vmatpush1.msra.mxu0 0.0
    %158 = vmatprep.subr.mxu0 0.0
    %159 = vmatpush1.msra.mxu0 0.0
    %160 = vmatprep.subr.mxu0 0.0
    %161 = vmatpush1.msra.mxu0 0.0
    %162 = vmatprep.subr.mxu0 0.0
    %163 = vmatpush1.msra.mxu0 0.0
    %164 = vmatprep.subr.mxu0 0.0
    %165 = vmatpush1.msra.mxu0 0.0
    %166 = vmatprep.subr.mxu0 0.0
    %167 = vmatpush1.msra.mxu0 0.0
    %168 = vmatprep.subr.mxu0 0.0
    %169 = vmatpush1.msra.mxu0 0.0
    %170 = vmatprep.mubr.f32.mxu0 0.0
    %171 = vmatmul.mubr.f32.gmra.mrb[0].mxu0 %v104
    %v172 = vpop.f32.mrb[0].mxu0
    %v173 = vadd.f32 0.0, %v172
    %v174 = vpop.f32.mrb[0].mxu0
    %175 = vdwg.mxu0
    %v176 = vmul.f32 %v95, %v95
    %vm177 = vcmask 130048
    %v178 = vsel %vm177, %v176, 0.0
    %179 = vadd.xlane.f32.xlu0 %v178
    %v180 = vpop.xlane.xlu0 %179
    %s181 = sld [smem:[#allocation2]]
    %v182 = vstv %s181
    %v183 = vadd.f32 %v95, %v182
    %v184 = vsub.f32 %v180, %v173
    %v185 = vmul.f32 %v184, 0.5
    %187 = vrot.lane.b32.xlu0 %v185, 16
    %v188 = vpop.permute.xlu0 %187
    %v190 = vadd.f32 %v183, %v188
    %192 = vset.pattern.permute.xlu0 16
    %193 = vperm.xlu0 %192, %v190
    %v194 = vpop.permute.xlu0 %193
    %v195 = vlaneseq
    %v196 = vand.u32 %v195, 127
    %v197 = vlaneseq
    %v198 = vshrl.u32 %v197, 7
    %v199 = vsub.s32 %v196, %v198
    %v200 = vrot.slane %v194, %v199
    %vm202 = vcmask 57344
    %203 = vst.msk [vmem:[#allocation3] sm:$0x1] %vm202, %v200
    // Predicated region
    $region18: #{tpu_custom_call.1} parent=1 // pred_check
      _
    $region19: #{tpu_custom_call.1} parent=1 // pred_check_branch
      %205 = sbr.rel (0) target = $region21
    $region20: #{tpu_custom_call.1} parent=1 // pred_region
      %s207 = ssub.s32 16, 16
      %208 = vsyncadd [#allocation4], %s207
      %s210 = sshll.u32 [#allocation3], 4
      %s211 = int_to_ptr.vmem [resolvable:$true] %s210
      %213 = dma.vmem_to_hbm [thread:$0]  %s211, 16, %s4, [#allocation4]
    $region21: #{tpu_custom_call.1} parent=1 // pred_fallthru
      _
    // Predicated region
    $region22: #{tpu_custom_call.1} parent=1 // pred_check
      _
    $region23: #{tpu_custom_call.1} parent=1 // pred_check_branch
      %215 = sbr.rel (0) target = $region25
    $region24: #{tpu_custom_call.1} parent=1 // pred_region
      %216 = dma.done [#allocation4], 16
    $region25: #{tpu_custom_call.1} parent=1 // pred_fallthru
      _
    %217 = vsyncpa [#allocation4], 1

// kernel: tpu_custom_call.1
$region0: #{tpu_custom_call.1}
  #allocation0 [shape = 'u32[]', space=smem, size = 0x4, offset = 0x4, fixed_abs, tag = 'smem constant byte address 0x4 - core index']
  #allocation1 [shape = 'u32[144,128]{1,0:T(1,128)}', space=vmem, size = 0x12000, scoped, tag = 'internal scratch']
  #allocation2 [shape = 'f32[1,1]{1,0:T(1,128)S(6)}', space=smem, size = 0x200, scoped, tag = 'scoped memory for tpu_custom_call.1']
  %s0 = inlined_call_operand.vmem [shape: f32[8,32], index: 0, kind: input, shape index: {}]
  %s1 = inlined_call_operand.vmem [shape: f32[32,17], index: 1, kind: input, shape index: {}]
  %s2 = inlined_call_operand.vmem [shape: f32[32,1], index: 2, kind: input, shape index: {}]
  %s3 = inlined_call_operand.<no memory space> [shape: f32[1,1], index: 3, kind: input, shape index: {}]
  %s4 = inlined_call_operand.vmem [shape: f32[8,1], index: 4, kind: output, shape index: {}]
  %s5 = sld [smem:[#allocation0]]
  $region26: #{tpu_custom_call.1} parent=0
    _
  %s7 = ssub.s32 1, %s5
  %s8 = scalar_select 0, %s7, %s5
  %9 = sst [smem:[#allocation2]] %s3
  // Predicated region
  $region2: #{tpu_custom_call.1} parent=0 // pred_check
    _
  $region3: #{tpu_custom_call.1} parent=0 // pred_check_branch
    %11 = sbr.rel (0) target = $region5
  $region4: #{tpu_custom_call.1} parent=0 // pred_region
    _
  $region5: #{tpu_custom_call.1} parent=0 // pred_fallthru
    _
  // Predicated region
  $region6: #{tpu_custom_call.1} parent=0 // pred_check
    _
  $region7: #{tpu_custom_call.1} parent=0 // pred_check_branch
    %13 = sbr.rel (0) target = $region9
  $region8: #{tpu_custom_call.1} parent=0 // pred_region
    _
  $region9: #{tpu_custom_call.1} parent=0 // pred_fallthru
    _
  // Predicated region
  $region10: #{tpu_custom_call.1} parent=0 // pred_check
    _
  $region11: #{tpu_custom_call.1} parent=0 // pred_check_branch
    %15 = sbr.rel (0) target = $region13
  $region12: #{tpu_custom_call.1} parent=0 // pred_region
    _
  $region13: #{tpu_custom_call.1} parent=0 // pred_fallthru
    _
  // Predicated region
  $region14: #{tpu_custom_call.1} parent=0 // pred_check
    _
  $region15: #{tpu_custom_call.1} parent=0 // pred_check_branch
    %17 = sbr.rel (0) target = $region17
  $region16: #{tpu_custom_call.1} parent=0 // pred_region
    _
  $region17: #{tpu_custom_call.1} parent=0 // pred_fallthru
    _
  %v18 = vld [vmem:[%s0] sm:$0xff]
  %v19 = vld [vmem:[%s1] sm:$0xff]
  %v20 = vld [vmem:[%s1 + $0x8] sm:$0xff]
  %v21 = vld [vmem:[%s1 + $0x10] sm:$0xff]
  %v22 = vld [vmem:[%s1 + $0x18] sm:$0xff]
  %vm23 = vcmask 261120
  %v25 = vsel %vm23, %v18, 0
  %27 = vmatprep.subr.mxu0 0.0
  %28 = vmatpush1.msra.mxu0 %v19
  %29 = vmatprep.subr.mxu0 0.0
  %30 = vmatpush1.msra.mxu0 %v20
  %31 = vmatprep.subr.mxu0 0.0
  %32 = vmatpush1.msra.mxu0 %v21
  %33 = vmatprep.subr.mxu0 0.0
  %34 = vmatpush1.msra.mxu0 %v22
  %35 = vmatprep.subr.mxu0 0.0
  %36 = vmatpush1.msra.mxu0 0.0
  %37 = vmatprep.subr.mxu0 0.0
  %38 = vmatpush1.msra.mxu0 0.0
  %39 = vmatprep.subr.mxu0 0.0
  %40 = vmatpush1.msra.mxu0 0.0
  %41 = vmatprep.subr.mxu0 0.0
  %42 = vmatpush1.msra.mxu0 0.0
  %43 = vmatprep.subr.mxu0 0.0
  %44 = vmatpush1.msra.mxu0 0.0
  %45 = vmatprep.subr.mxu0 0.0
  %46 = vmatpush1.msra.mxu0 0.0
  %47 = vmatprep.subr.mxu0 0.0
  %48 = vmatpush1.msra.mxu0 0.0
  %49 = vmatprep.subr.mxu0 0.0
  %50 = vmatpush1.msra.mxu0 0.0
  %51 = vmatprep.subr.mxu0 0.0
  %52 = vmatpush1.msra.mxu0 0.0
  %53 = vmatprep.subr.mxu0 0.0
  %54 = vmatpush1.msra.mxu0 0.0
  %55 = vmatprep.subr.mxu0 0.0
  %56 = vmatpush1.msra.mxu0 0.0
  %57 = vmatprep.subr.mxu0 0.0
  %58 = vmatpush1.msra.mxu0 0.0
  %59 = vmatprep.subr.mxu0 0.0
  %60 = vmatpush1.msra.mxu0 0.0
  %61 = vmatprep.subr.mxu0 0.0
  %62 = vmatpush1.msra.mxu0 0.0
  %63 = vmatprep.subr.mxu0 0.0
  %64 = vmatpush1.msra.mxu0 0.0
  %65 = vmatprep.subr.mxu0 0.0
  %66 = vmatpush1.msra.mxu0 0.0
  %67 = vmatprep.subr.mxu0 0.0
  %68 = vmatpush1.msra.mxu0 0.0
  %69 = vmatprep.subr.mxu0 0.0
  %70 = vmatpush1.msra.mxu0 0.0
  %71 = vmatprep.subr.mxu0 0.0
  %72 = vmatpush1.msra.mxu0 0.0
  %73 = vmatprep.subr.mxu0 0.0
  %74 = vmatpush1.msra.mxu0 0.0
  %75 = vmatprep.subr.mxu0 0.0
  %76 = vmatpush1.msra.mxu0 0.0
  %77 = vmatprep.subr.mxu0 0.0
  %78 = vmatpush1.msra.mxu0 0.0
  %79 = vmatprep.subr.mxu0 0.0
  %80 = vmatpush1.msra.mxu0 0.0
  %81 = vmatprep.subr.mxu0 0.0
  %82 = vmatpush1.msra.mxu0 0.0
  %83 = vmatprep.subr.mxu0 0.0
  %84 = vmatpush1.msra.mxu0 0.0
  %85 = vmatprep.subr.mxu0 0.0
  %86 = vmatpush1.msra.mxu0 0.0
  %87 = vmatprep.subr.mxu0 0.0
  %88 = vmatpush1.msra.mxu0 0.0
  %89 = vmatprep.subr.mxu0 0.0
  %90 = vmatpush1.msra.mxu0 0.0
  %91 = vmatprep.mubr.f32.mxu0 0.0
  %92 = vmatmul.mubr.f32.gmra.mrb[0].mxu0 %v25
  %v93 = vpop.f32.mrb[0].mxu0
  %v94 = vadd.f32 0.0, %v93
  %v95 = vpop.f32.mrb[0].mxu0
  %96 = vdwg.mxu0
  %v97 = vmul.f32 %v18, %v18
  %v98 = vld [vmem:[%s2] sm:$0xff]
  %v99 = vld [vmem:[%s2 + $0x8] sm:$0xff]
  %v100 = vld [vmem:[%s2 + $0x10] sm:$0xff]
  %v101 = vld [vmem:[%s2 + $0x18] sm:$0xff]
  %v103 = vsel %vm23, %v97, 0
  %105 = vmatprep.subr.mxu0 0.0
  %106 = vmatpush1.msra.mxu0 %v98
  %107 = vmatprep.subr.mxu0 0.0
  %108 = vmatpush1.msra.mxu0 %v99
  %109 = vmatprep.subr.mxu0 0.0
  %110 = vmatpush1.msra.mxu0 %v100
  %111 = vmatprep.subr.mxu0 0.0
  %112 = vmatpush1.msra.mxu0 %v101
  %113 = vmatprep.subr.mxu0 0.0
  %114 = vmatpush1.msra.mxu0 0.0
  %115 = vmatprep.subr.mxu0 0.0
  %116 = vmatpush1.msra.mxu0 0.0
  %117 = vmatprep.subr.mxu0 0.0
  %118 = vmatpush1.msra.mxu0 0.0
  %119 = vmatprep.subr.mxu0 0.0
  %120 = vmatpush1.msra.mxu0 0.0
  %121 = vmatprep.subr.mxu0 0.0
  %122 = vmatpush1.msra.mxu0 0.0
  %123 = vmatprep.subr.mxu0 0.0
  %124 = vmatpush1.msra.mxu0 0.0
  %125 = vmatprep.subr.mxu0 0.0
  %126 = vmatpush1.msra.mxu0 0.0
  %127 = vmatprep.subr.mxu0 0.0
  %128 = vmatpush1.msra.mxu0 0.0
  %129 = vmatprep.subr.mxu0 0.0
  %130 = vmatpush1.msra.mxu0 0.0
  %131 = vmatprep.subr.mxu0 0.0
  %132 = vmatpush1.msra.mxu0 0.0
  %133 = vmatprep.subr.mxu0 0.0
  %134 = vmatpush1.msra.mxu0 0.0
  %135 = vmatprep.subr.mxu0 0.0
  %136 = vmatpush1.msra.mxu0 0.0
  %137 = vmatprep.subr.mxu0 0.0
  %138 = vmatpush1.msra.mxu0 0.0
  %139 = vmatprep.subr.mxu0 0.0
  %140 = vmatpush1.msra.mxu0 0.0
  %141 = vmatprep.subr.mxu0 0.0
  %142 = vmatpush1.msra.mxu0 0.0
  %143 = vmatprep.subr.mxu0 0.0
  %144 = vmatpush1.msra.mxu0 0.0
  %145 = vmatprep.subr.mxu0 0.0
  %146 = vmatpush1.msra.mxu0 0.0
  %147 = vmatprep.subr.mxu0 0.0
  %148 = vmatpush1.msra.mxu0 0.0
  %149 = vmatprep.subr.mxu0 0.0
  %150 = vmatpush1.msra.mxu0 0.0
  %151 = vmatprep.subr.mxu0 0.0
  %152 = vmatpush1.msra.mxu0 0.0
  %153 = vmatprep.subr.mxu0 0.0
  %154 = vmatpush1.msra.mxu0 0.0
  %155 = vmatprep.subr.mxu0 0.0
  %156 = vmatpush1.msra.mxu0 0.0
  %157 = vmatprep.subr.mxu0 0.0
  %158 = vmatpush1.msra.mxu0 0.0
  %159 = vmatprep.subr.mxu0 0.0
  %160 = vmatpush1.msra.mxu0 0.0
  %161 = vmatprep.subr.mxu0 0.0
  %162 = vmatpush1.msra.mxu0 0.0
  %163 = vmatprep.subr.mxu0 0.0
  %164 = vmatpush1.msra.mxu0 0.0
  %165 = vmatprep.subr.mxu0 0.0
  %166 = vmatpush1.msra.mxu0 0.0
  %167 = vmatprep.subr.mxu0 0.0
  %168 = vmatpush1.msra.mxu0 0.0
  %169 = vmatprep.mubr.f32.mxu0 0.0
  %170 = vmatmul.mubr.f32.gmra.mrb[0].mxu0 %v103
  %v171 = vpop.f32.mrb[0].mxu0
  %v172 = vadd.f32 0.0, %v171
  %v173 = vpop.f32.mrb[0].mxu0
  %174 = vdwg.mxu0
  %v175 = vmul.f32 %v94, %v94
  %vm176 = vcmask 130048
  %v177 = vsel %vm176, %v175, 0.0
  %178 = vadd.xlane.f32.xlu0 %v177
  %v179 = vpop.xlane.xlu0 %178
  %s180 = sld [smem:[#allocation2]]
  %v181 = vstv %s180
  %v182 = vadd.f32 %v94, %v181
  %v183 = vsub.f32 %v179, %v172
  %v184 = vmul.f32 %v183, 0.5
  %186 = vrot.lane.b32.xlu0 %v184, 16
  %v187 = vpop.permute.xlu0 %186
  %v189 = vadd.f32 %v182, %v187
  %191 = vrot.lane.b32.xlu0 %v189, 112
  %v192 = vpop.permute.xlu0 %191
  %vm194 = vcmask 7168
  %195 = vst.msk [vmem:[%s4] sm:$0xff] %vm194, %v192
  // Predicated region
  $region18: #{tpu_custom_call.1} parent=0 // pred_check
    _
  $region19: #{tpu_custom_call.1} parent=0 // pred_check_branch
    %197 = sbr.rel (0) target = $region21
  $region20: #{tpu_custom_call.1} parent=0 // pred_region
    _
  $region21: #{tpu_custom_call.1} parent=0 // pred_fallthru
    _
  // Predicated region
  $region22: #{tpu_custom_call.1} parent=0 // pred_check
    _
  $region23: #{tpu_custom_call.1} parent=0 // pred_check_branch
    %199 = sbr.rel (0) target = $region25
  $region24: #{tpu_custom_call.1} parent=0 // pred_region
    _
  $region25: #{tpu_custom_call.1} parent=0 // pred_fallthru
    _

</llo_original>
